<compile_context>
chip_gen: v7x
topology: tpu7x:2x2x1
jax: 0.10.0
libtpu: 0.0.40
codegen_flags: <defaults>
</compile_context>

<pallas_src>
import jax
import jax.numpy as jnp
from jax.experimental import pallas as pl
from jax.experimental.pallas import tpu as pltpu

LANE = 128          # lane width / feature alignment
NODE_ALIGN = 256    # node-dim alignment so tm = tk = 256 always divide


def _round_up(x, m):
    return ((x + m - 1) // m) * m


def _vmem_capacity():
    try:
        return int(pltpu.get_tpu_info().vmem_capacity_bytes)
    except Exception:
        return 64 * 1024 * 1024  # conservative (v7x per-TC capacity)


# --------------------------- Pallas kernels ----------------------------------
def _xw_kernel(x_ref, w_ref, o_ref):
    # x_ref: (tm, Fin) f32, w_ref: (Fin, Fout) bf16, o_ref: (tm, Fout) bf16
    o_ref[...] = jnp.dot(x_ref[...].astype(jnp.bfloat16), w_ref[...],
                         preferred_element_type=jnp.float32).astype(o_ref.dtype)


def feature_transform(x, w, *, tm=256):
    """XW = X @ W, computed exactly once per layer (tiled over rows of X)."""
    n, f_in = x.shape
    f_out = w.shape[1]
    assert n % tm == 0
    return pl.pallas_call(
        _xw_kernel,
        out_shape=jax.ShapeDtypeStruct((n, f_out), jnp.bfloat16),
        grid=(n // tm,),
        in_specs=[
            pl.BlockSpec((tm, f_in), lambda i: (i, 0)),
            pl.BlockSpec((f_in, f_out), lambda i: (0, 0)),   # weight resident
        ],
        out_specs=pl.BlockSpec((tm, f_out), lambda i: (i, 0)),
        compiler_params=pltpu.CompilerParams(
            dimension_semantics=("parallel",)),
    )(x, w)


def _aggregate_resident_kernel(a_ref, xw_ref, b_ref, o_ref):
    # a_ref: (tm, N) bf16 row slab, xw_ref: (N, Fout) bf16 (VMEM-resident),
    # b_ref: (1, Fout) f32, o_ref: (tm, Fout) f32.  Full-depth contraction.
    acc = jnp.dot(a_ref[...], xw_ref[...], preferred_element_type=jnp.float32)
    o_ref[...] = jnp.maximum(acc + b_ref[...], 0.0)          # bias + ReLU


def _aggregate_ktiled_kernel(a_ref, xw_ref, b_ref, o_ref):
    # Fallback for huge graphs: K-tiled, accumulating directly into o_ref
    # (output block index ignores k -> output-resident across the reduction).
    k = pl.program_id(1)

    @pl.when(k == 0)
    def _():
        o_ref[...] = jnp.zeros_like(o_ref)

    o_ref[...] += jnp.dot(a_ref[...], xw_ref[...],
                          preferred_element_type=jnp.float32)

    @pl.when(k == pl.num_programs(1) - 1)
    def _():
        o_ref[...] = jnp.maximum(o_ref[...] + b_ref[...], 0.0)


def aggregate(a, xw, b, *, tm=256, tk=256, resident_budget=24 * 1024 * 1024):
    """ReLU(A_hat @ XW + b) with f32 accumulation (bf16 MXU operands)."""
    n = a.shape[0]
    f_out = xw.shape[1]
    assert n % tm == 0 and n % tk == 0
    # VMEM to keep XW fully resident and stream (tm, N) A row slabs.
    resident_bytes = (n * f_out * xw.dtype.itemsize        # XW, resident
                      + 2 * tm * n * a.dtype.itemsize      # A slab, 2 buffers
                      + 2 * tm * f_out * 4)                # out tile, 2 buffers
    if resident_bytes <= resident_budget:
        # XW is read from HBM exactly once; no reduction grid axis needed.
        return pl.pallas_call(
            _aggregate_resident_kernel,
            out_shape=jax.ShapeDtypeStruct((n, f_out), jnp.float32),
            grid=(n // tm,),
            in_specs=[
                pl.BlockSpec((tm, n), lambda i: (i, 0)),       # A row slab
                pl.BlockSpec((n, f_out), lambda i: (0, 0)),    # XW resident
                pl.BlockSpec((1, f_out), lambda i: (0, 0)),    # bias
            ],
            out_specs=pl.BlockSpec((tm, f_out), lambda i: (i, 0)),
            compiler_params=pltpu.CompilerParams(
                dimension_semantics=("parallel",)),
        )(a, xw, b)
    # Huge-graph fallback: bounded per-step VMEM regardless of N.
    return pl.pallas_call(
        _aggregate_ktiled_kernel,
        out_shape=jax.ShapeDtypeStruct((n, f_out), jnp.float32),
        grid=(n // tm, n // tk),
        in_specs=[
            pl.BlockSpec((tm, tk), lambda i, k: (i, k)),       # adjacency tile
            pl.BlockSpec((tk, f_out), lambda i, k: (k, 0)),    # XW K-slab
            pl.BlockSpec((1, f_out), lambda i, k: (0, 0)),     # bias
        ],
        out_specs=pl.BlockSpec((tm, f_out), lambda i, k: (i, 0)),
        compiler_params=pltpu.CompilerParams(
            dimension_semantics=("parallel", "arbitrary")),
    )(a, xw, b)


def _fused_kernel(a_ref, x_ref, w_ref, b_ref, o_ref):
    # grid axis = layer index; A_hat and the evolving z (== o_ref, constant
    # output block index) stay resident in VMEM across layers.
    layer = pl.program_id(0)

    @pl.when(layer == 0)
    def _():
        o_ref[...] = x_ref[...]

    xw = jnp.dot(o_ref[...].astype(jnp.bfloat16), w_ref[...],
                 preferred_element_type=jnp.float32)
    agg = jnp.dot(a_ref[...], xw.astype(jnp.bfloat16),
                  preferred_element_type=jnp.float32)
    o_ref[...] = jnp.maximum(agg + b_ref[...], 0.0)


def gconv_fused(a, x, w_stacked, b_stacked):
    """All layers in one pallas_call (small-graph regime, everything in VMEM)."""
    n, f = x.shape
    num_layers = w_stacked.shape[0]
    cap = _vmem_capacity()
    return pl.pallas_call(
        _fused_kernel,
        out_shape=jax.ShapeDtypeStruct((n, f), jnp.float32),
        grid=(num_layers,),
        in_specs=[
            pl.BlockSpec((n, n), lambda l: (0, 0)),            # A_hat (bf16, resident)
            pl.BlockSpec((n, f), lambda l: (0, 0)),            # initial features
            pl.BlockSpec((None, f, f), lambda l: (l, 0, 0)),   # W_l (bf16)
            pl.BlockSpec((None, 1, f), lambda l: (l, 0, 0)),   # b_l (f32)
        ],
        out_specs=pl.BlockSpec((n, f), lambda l: (0, 0)),      # evolving z (resident)
        compiler_params=pltpu.CompilerParams(
            dimension_semantics=("arbitrary",),
            vmem_limit_bytes=int(cap * 3 // 4)),
    )(a, x, w_stacked, b_stacked)


def _fused_vmem_bytes(n, f):
    # a (bf16) + x (f32) + out/z (f32) + double-buffered W (bf16) + b (f32).
    return 2 * n * n + 4 * n * f + 4 * n * f + 2 * (2 * f * f) + 2 * 4 * f


# ------------------------------- JAX glue -------------------------------------
# TODO(synk): adjacency construction (COO scatter + degree normalization) stays
# as JAX glue; note PyG collapses pre-existing self loops while this sums
# duplicates (only differs on multigraphs with repeated self loops).
def gcn_norm_dense(edge_index, edge_weight, num_nodes, num_nodes_padded):
    """Dense D^{-1/2}(A + remaining self loops)D^{-1/2}, matching PyG gcn_norm."""
    row, col = edge_index[0], edge_index[1]   # row = source, col = target
    num_edges = row.shape[0]
    if edge_weight is None:
        edge_weight = jnp.ones((num_edges,), dtype=jnp.float32)
    edge_weight = edge_weight.astype(jnp.float32)
    # add_remaining_self_loops: only nodes without an existing self loop get one.
    is_loop = (row == col).astype(jnp.float32)
    has_loop = jnp.zeros((num_nodes,), jnp.float32).at[row].add(is_loop) > 0
    loop = jnp.arange(num_nodes, dtype=row.dtype)
    loop_w = jnp.where(has_loop, 0.0, 1.0).astype(jnp.float32)
    row = jnp.concatenate([row, loop])
    col = jnp.concatenate([col, loop])
    w = jnp.concatenate([edge_weight, loop_w])
    deg = jnp.zeros((num_nodes,), jnp.float32).at[col].add(w)
    dinv = jnp.where(deg > 0, 1.0 / jnp.sqrt(deg), 0.0)
    norm = dinv[row] * w * dinv[col]
    # out[i] = sum over edges (j -> i) of norm * x[j]  =>  A[i, j] += norm
    a = jnp.zeros((num_nodes_padded, num_nodes_padded), jnp.float32)
    a = a.at[col, row].add(norm)
    return a


class GConvPallas:
    """Mirror of the PyTorch GConv module (activation = ReLU)."""

    def __init__(self, input_dim, node_num, hidden_dim, num_layers, key):
        keys = jax.random.split(key, num_layers + 1)
        self.node_num = node_num
        self.input_dim = input_dim
        self.hidden_dim = hidden_dim
        self.num_layers = num_layers
        self.n_pad = _round_up(node_num, NODE_ALIGN)
        self.f_pad = _round_up(max(input_dim, hidden_dim), LANE)

        # learnable node features: torch.rand -> U[0, 1)
        x = jax.random.uniform(keys[0], (node_num, input_dim), dtype=jnp.float32)
        self.x = x
        self.x_pad = jnp.zeros((self.n_pad, self.f_pad), jnp.float32).at[
            :node_num, :input_dim].set(x)

        dims = [input_dim] + [hidden_dim] * num_layers
        self.weights, self.biases = [], []
        w_pad, b_pad = [], []
        for l in range(num_layers):
            fan_in, fan_out = dims[l], dims[l + 1]
            limit = jnp.sqrt(6.0 / (fan_in + fan_out))  # glorot uniform
            w = jax.random.uniform(keys[l + 1], (fan_in, fan_out),
                                   dtype=jnp.float32, minval=-limit, maxval=limit)
            b = jnp.zeros((fan_out,), jnp.float32)
            self.weights.append(w)
            self.biases.append(b)
            w_pad.append(jnp.zeros((self.f_pad, self.f_pad), jnp.float32).at[
                :fan_in, :fan_out].set(w))
            b_pad.append(jnp.zeros((1, self.f_pad), jnp.float32).at[
                0, :fan_out].set(b))
        self.w_pad = jnp.stack(w_pad).astype(jnp.bfloat16)   # (L, Fpad, Fpad) bf16
        self.b_pad = jnp.stack(b_pad)                        # (L, 1, Fpad) f32

    def __call__(self, edge_index, edge_weight=None, *, fused=None):
        a_pad = gcn_norm_dense(edge_index, edge_weight, self.node_num, self.n_pad)
        a_bf16 = a_pad.astype(jnp.bfloat16)   # bf16 MXU operand, half the bytes
        if fused is None:
            cap = _vmem_capacity()
            # Fused path runs the layer axis on a single TensorCore, so only
            # take it for small graphs; medium/large graphs go tiled so the
            # "parallel" row axis can shard across TCs (v7x) and stay in VMEM.
            fused = (_fused_vmem_bytes(self.n_pad, self.f_pad) <= cap // 4
                     and self.n_pad <= 2048)
        if fused:
            z = gconv_fused(a_bf16, self.x_pad, self.w_pad, self.b_pad)
        else:
            z = self.x_pad
            for l in range(self.num_layers):
                xw = feature_transform(z, self.w_pad[l])   # X@W once (bf16 out)
                z = aggregate(a_bf16, xw, self.b_pad[l])   # A_hat @ XW + b, ReLU
        return z[:self.node_num, :self.hidden_dim]

    def reference(self, edge_index, edge_weight=None):
        a = gcn_norm_dense(edge_index, edge_weight, self.node_num, self.node_num)
        z = self.x
        for w, b in zip(self.weights, self.biases):
            z = jnp.maximum(a @ (z @ w) + b[None, :], 0.0)
        return z


if __name__ == "__main__":
    key = jax.random.PRNGKey(0)
    k_m1, k_s1, k_d1, k_m2, k_s2, k_d2 = jax.random.split(key, 6)

    # bf16 MXU operands with f32 accumulation -> ~1e-2-level agreement vs f32.
    ATOL = RTOL = 5e-2

    # ---- Test 1: small graph -> fully fused multi-layer kernel path --------
    node_num, input_dim, hidden_dim, num_layers, num_edges = 16, 32, 32, 2, 40
    model = GConvPallas(input_dim, node_num, hidden_dim, num_layers, k_m1)
    src = jax.random.randint(k_s1, (num_edges,), 0, node_num, dtype=jnp.int32)
    dst = jax.random.randint(k_d1, (num_edges,), 0, node_num, dtype=jnp.int32)
    edge_index = jnp.stack([src, dst], axis=0)

    out = jax.block_until_ready(model(edge_index))
    ref = model.reference(edge_index)
    assert out.shape == (node_num, hidden_dim)
    assert jnp.allclose(out, ref, atol=ATOL, rtol=RTOL), \
        float(jnp.max(jnp.abs(out - ref)))

    # ---- Test 2: larger graph -> tiled path (hoisted XW + resident-XW agg) --
    node_num2, input_dim2, hidden_dim2, num_layers2, num_edges2 = 256, 64, 128, 2, 2048
    model2 = GConvPallas(input_dim2, node_num2, hidden_dim2, num_layers2, k_m2)
    src2 = jax.random.randint(k_s2, (num_edges2,), 0, node_num2, dtype=jnp.int32)
    dst2 = jax.random.randint(k_d2, (num_edges2,), 0, node_num2, dtype=jnp.int32)
    edge_index2 = jnp.stack([src2, dst2], axis=0)

    out2 = jax.block_until_ready(model2(edge_index2, fused=False))
    ref2 = model2.reference(edge_index2)
    assert out2.shape == (node_num2, hidden_dim2)
    assert jnp.allclose(out2, ref2, atol=ATOL, rtol=RTOL), \
        float(jnp.max(jnp.abs(out2 - ref2)))

    print("KERNEL_OK")
</pallas_src>

<mosaic_0001>
module attributes {stable_mosaic.version = 11 : i64} {
  func.func @_fused_kernel(%arg0: i32, %arg1: memref<256x256xbf16, #tpu.memory_space<vmem>>, %arg2: memref<256x128xf32, #tpu.memory_space<vmem>>, %arg3: memref<1x128x128xbf16, #tpu.memory_space<vmem>>, %arg4: memref<1x1x128xf32, #tpu.memory_space<vmem>>, %arg5: memref<256x128xf32, #tpu.memory_space<vmem>>) attributes {dimension_semantics = [#tpu.dimension_semantics<arbitrary>], iteration_bounds = array<i64: 2>, scalar_prefetch = 0 : i64, scratch_operands = 0 : i64, tpu.core_type = #tpu.core_type<tc>, window_params = [{pipeline_mode = #tpu.pipeline_mode<synchronous>, transform_indices = @transform_0, window_bounds = array<i64: 256, 256>}, {pipeline_mode = #tpu.pipeline_mode<synchronous>, transform_indices = @transform_1, window_bounds = array<i64: 256, 128>}, {transform_indices = @transform_2, window_bounds = array<i64: 1, 128, 128>}, {transform_indices = @transform_3, window_bounds = array<i64: 1, 1, 128>}, {pipeline_mode = #tpu.pipeline_mode<synchronous>, transform_indices = @transform_4, window_bounds = array<i64: 256, 128>}]} {
    %c0_i32 = arith.constant 0 : i32
    %0 = arith.cmpi eq, %arg0, %c0_i32 : i32
    %1 = arith.extui %0 : i1 to i32
    %c0_i32_0 = arith.constant 0 : i32
    %2 = arith.cmpi ne, %1, %c0_i32_0 : i32
    scf.if %2 {
      %c0_14 = arith.constant 0 : index
      %c0_15 = arith.constant 0 : index
      %18 = vector.load %arg2[%c0_14, %c0_15] : memref<256x128xf32, #tpu.memory_space<vmem>>, vector<256x128xf32>
      %c0_16 = arith.constant 0 : index
      %c0_17 = arith.constant 0 : index
      %19 = vector.load %arg5[%c0_16, %c0_17] : memref<256x128xf32, #tpu.memory_space<vmem>>, vector<256x128xf32>
      tpu.vector_store %arg5[%c0_16, %c0_17], %18 {strides = array<i32>} : memref<256x128xf32, #tpu.memory_space<vmem>>, vector<256x128xf32>,
    } else {
    }
    %c0 = arith.constant 0 : index
    %c0_1 = arith.constant 0 : index
    %3 = vector.load %arg5[%c0, %c0_1] : memref<256x128xf32, #tpu.memory_space<vmem>>, vector<256x128xf32>
    %4 = arith.truncf %3 : vector<256x128xf32> to vector<256x128xbf16>
    %c0_2 = arith.constant 0 : index
    %c0_3 = arith.constant 0 : index
    %c0_4 = arith.constant 0 : index
    %5 = vector.load %arg3[%c0_2, %c0_3, %c0_4] : memref<1x128x128xbf16, #tpu.memory_space<vmem>>, vector<1x128x128xbf16>
    %6 = vector.shape_cast %5 : vector<1x128x128xbf16> to vector<128x128xbf16>
    %cst = arith.constant dense<0.000000e+00> : vector<256x128xf32>
    %7 = tpu.matmul %4, %6, %cst {dimension_numbers = #tpu.dot_dimension_numbers<[1], [0], [0], [1], [0, 0, 1, 1], [], []>} : vector<256x128xbf16>, vector<128x128xbf16>, vector<256x128xf32> -> vector<256x128xf32>
    %c0_5 = arith.constant 0 : index
    %c0_6 = arith.constant 0 : index
    %8 = vector.load %arg1[%c0_5, %c0_6] : memref<256x256xbf16, #tpu.memory_space<vmem>>, vector<256x256xbf16>
    %9 = arith.truncf %7 : vector<256x128xf32> to vector<256x128xbf16>
    %cst_7 = arith.constant dense<0.000000e+00> : vector<256x128xf32>
    %10 = tpu.matmul %8, %9, %cst_7 {dimension_numbers = #tpu.dot_dimension_numbers<[1], [0], [0], [1], [0, 0, 1, 1], [], []>} : vector<256x256xbf16>, vector<256x128xbf16>, vector<256x128xf32> -> vector<256x128xf32>
    %c0_8 = arith.constant 0 : index
    %c0_9 = arith.constant 0 : index
    %c0_10 = arith.constant 0 : index
    %11 = vector.load %arg4[%c0_8, %c0_9, %c0_10] : memref<1x1x128xf32, #tpu.memory_space<vmem>>, vector<1x1x128xf32>
    %12 = vector.shape_cast %11 : vector<1x1x128xf32> to vector<1x128xf32>
    %13 = vector.broadcast %12 : vector<1x128xf32> to vector<256x128xf32>
    %14 = arith.addf %10, %13 : vector<256x128xf32>
    %cst_11 = arith.constant 0.000000e+00 : f32
    %15 = vector.broadcast %cst_11 : f32 to vector<256x128xf32>
    %16 = arith.maximumf %14, %15 : vector<256x128xf32>
    %c0_12 = arith.constant 0 : index
    %c0_13 = arith.constant 0 : index
    %17 = vector.load %arg5[%c0_12, %c0_13] : memref<256x128xf32, #tpu.memory_space<vmem>>, vector<256x128xf32>
    tpu.vector_store %arg5[%c0_12, %c0_13], %16 {strides = array<i32>} : memref<256x128xf32, #tpu.memory_space<vmem>>, vector<256x128xf32>,
    return
  }
  func.func @transform_0(%arg0: i32) -> (i32, i32) {
    %c0_i32 = arith.constant 0 : i32
    %c0_i32_0 = arith.constant 0 : i32
    %c0_i32_1 = arith.constant 0 : i32
    return %c0_i32, %c0_i32_0 : i32, i32
  }
  func.func @transform_1(%arg0: i32) -> (i32, i32) {
    %c0_i32 = arith.constant 0 : i32
    %c0_i32_0 = arith.constant 0 : i32
    %c0_i32_1 = arith.constant 0 : i32
    return %c0_i32, %c0_i32_0 : i32, i32
  }
  func.func @transform_2(%arg0: i32) -> (i32, i32, i32) {
    %c0_i32 = arith.constant 0 : i32
    %c0_i32_0 = arith.constant 0 : i32
    %c0_i32_1 = arith.constant 0 : i32
    return %arg0, %c0_i32, %c0_i32_0 : i32, i32, i32
  }
  func.func @transform_3(%arg0: i32) -> (i32, i32, i32) {
    %c0_i32 = arith.constant 0 : i32
    %c0_i32_0 = arith.constant 0 : i32
    %c0_i32_1 = arith.constant 0 : i32
    return %arg0, %c0_i32, %c0_i32_0 : i32, i32, i32
  }
  func.func @transform_4(%arg0: i32) -> (i32, i32) {
    %c0_i32 = arith.constant 0 : i32
    %c0_i32_0 = arith.constant 0 : i32
    %c0_i32_1 = arith.constant 0 : i32
    return %c0_i32, %c0_i32_0 : i32, i32
  }
}

</mosaic_0001>

<llo_original>
// kernel: tpu_custom_call.1
$region0: #{tpu_custom_call.1}
  #allocation0 [shape = 'u32[]', space=smem, size = 0x4, offset = 0x4, fixed_abs, tag = 'smem constant byte address 0x4 - core index']
  #allocation1 [shape = 'u32[144,128]{1,0:T(1,128)}', space=vmem, size = 0x12000, scoped, tag = 'internal scratch']
  %s0 = inlined_call_operand.hbm [shape: bf16[256,256], index: 0, kind: input, shape index: {}]
  %s1 = inlined_call_operand.hbm [shape: f32[256,128], index: 1, kind: input, shape index: {}]
  %s2 = inlined_call_operand.hbm [shape: bf16[2,128,128], index: 2, kind: input, shape index: {}]
  %s3 = inlined_call_operand.vmem [shape: f32[2,1,128], index: 3, kind: input, shape index: {}]
  %s4 = inlined_call_operand.hbm [shape: f32[256,128], index: 4, kind: output, shape index: {}]
  %s5 = sld [smem:[#allocation0]]
  $region65: #{tpu_custom_call.1} parent=0
    _
  %s7 = ssub.s32 1, %s5
  %s8 = scalar_select 0, %s7, %s5
  $region1: #{tpu_custom_call.1} parent=0
    #allocation2 [shape = 'u8[131072]{0}', space=vmem, size = 0x20000, scoped, tag = 'input window, operand 0, single buffered']
    #allocation3 [shape = 's32[2]{0}', space=sflag, size = 0x8, scoped, tag = 'scoped memory for tpu_custom_call.1']
    #allocation4 [shape = 's32[2]{0}', space=sflag, size = 0x8, scoped, tag = 'scoped memory for tpu_custom_call.1']
    #allocation5 [shape = 'u8[131072]{0}', space=vmem, size = 0x20000, scoped, tag = 'input window, operand 1, single buffered']
    #allocation6 [shape = 's32[1]{0}', space=sflag, size = 0x4, scoped, tag = 'scoped memory for tpu_custom_call.1']
    #allocation7 [shape = 'u8[65536]{0}', space=vmem, size = 0x10000, scoped, tag = 'input window, operand 2']
    #allocation8 [shape = 'u8[131072]{0}', space=vmem, size = 0x20000, scoped, tag = 'output window, operand 0, single buffered']
    %9 = vsyncpa [#allocation3], 0
    %10 = vsyncpa [#allocation6], 0
    %11 = vsyncpa [#allocation4], 0
    loop: start=0, step=1, limit=4
    $region2: #{tpu_custom_call.1} parent=1 // loop_pre_header
      _
    $region3: #{tpu_custom_call.1} parent=1 // loop_header
      %s13 = sphi 0, %s17
      %p14 = scmp.ge.s32.totalorder %s13, 4
      %s21 = sphi 0, %s21
      %s23 = sphi 0, %s21
      %s24 = sphi 0, %s23
      %s38 = sphi 0, %s24
      %s42 = sphi 0, %s42
      %s44 = sphi 0, %s42
      %s45 = sphi 0, %s44
      %s59 = sphi 0, %s45
      %s65 = sphi 0, %s67
      %s68 = sphi 0, %s65
      %s69 = sphi 0, %s68
      %s85 = sphi 0, %s69
      %s91 = sphi 0, %s93
      %s94 = sphi 0, %s91
      %s95 = sphi 0, %s94
      %s111 = sphi 0, %s95
      %s115 = sphi 0, %s115
      %s117 = sphi 0, %s115
      %s118 = sphi 0, %s117
      %s132 = sphi 0, %s118
    $region4: #{tpu_custom_call.1} parent=1 // loop_header_branch
      %16 = sbr.rel (%p14) target = $region8
    $region5: #{tpu_custom_call.1} parent=1 // loop_body
      %s18 = ssub.s32 %s13, 1
      %s19 = ssub.s32 %s13, 2
      %s20 = sadd.s32 %s13, 1
      %s22 = sadd.s32 %s21, 1
      %p25 = scmp.eq.s32.totalorder %s13, 1
      %p26 = scmp.ne.s32.totalorder %s21, %s23
      %p27 = scmp.eq.s32.totalorder %s13, 0
      %p28 = por %p26, %p27
      %p29 = scmp.ne.s32.totalorder %s21, %s23
      %p30 = scmp.eq.s32.totalorder %s18, 1
      %p31 = por %p29, %p30
      %p32 = scmp.ne.s32.totalorder %s23, %s24
      %p33 = scmp.eq.s32.totalorder %s18, 0
      %p34 = por %p32, %p33
      %p35 = scmp.ne.s32.totalorder %s23, %s24
      %p36 = scmp.eq.s32.totalorder %s19, 1
      %p37 = por %p35, %p36
      %p39 = scmp.ne.s32.totalorder %s24, %s38
      %p40 = scmp.eq.s32.totalorder %s19, 0
      %p41 = por %p39, %p40
      %s43 = sadd.s32 %s42, 1
      %p46 = scmp.eq.s32.totalorder %s13, 1
      %p47 = scmp.ne.s32.totalorder %s42, %s44
      %p48 = scmp.eq.s32.totalorder %s13, 0
      %p49 = por %p47, %p48
      %p50 = scmp.ne.s32.totalorder %s42, %s44
      %p51 = scmp.eq.s32.totalorder %s18, 1
      %p52 = por %p50, %p51
      %p53 = scmp.ne.s32.totalorder %s44, %s45
      %p54 = scmp.eq.s32.totalorder %s18, 0
      %p55 = por %p53, %p54
      %p56 = scmp.ne.s32.totalorder %s44, %s45
      %p57 = scmp.eq.s32.totalorder %s19, 1
      %p58 = por %p56, %p57
      %p60 = scmp.ne.s32.totalorder %s45, %s59
      %p61 = scmp.eq.s32.totalorder %s19, 0
      %p62 = por %p60, %p61
      %s63 = ssub.s32 %s13, %s20
      %p64 = scmp.eq.s32.totalorder %s63, 0
      %s66 = sadd.s32 %s65, 1
      %s67 = scalar_select %p64, %s65, %s66
      %p70 = pneg %p64
      %p71 = scmp.eq.s32.totalorder %s13, 1
      %p72 = por %p70, %p71
      %p73 = scmp.ne.s32.totalorder %s65, %s68
      %p74 = scmp.eq.s32.totalorder %s13, 0
      %p75 = por %p73, %p74
      %p76 = scmp.ne.s32.totalorder %s65, %s68
      %p77 = scmp.eq.s32.totalorder %s18, 1
      %p78 = por %p76, %p77
      %p79 = scmp.ne.s32.totalorder %s68, %s69
      %p80 = scmp.eq.s32.totalorder %s18, 0
      %p81 = por %p79, %p80
      %p82 = scmp.ne.s32.totalorder %s68, %s69
      %p83 = scmp.eq.s32.totalorder %s19, 1
      %p84 = por %p82, %p83
      %p86 = scmp.ne.s32.totalorder %s69, %s85
      %p87 = scmp.eq.s32.totalorder %s19, 0
      %p88 = por %p86, %p87
      %s89 = ssub.s32 %s13, %s20
      %p90 = scmp.eq.s32.totalorder %s89, 0
      %s92 = sadd.s32 %s91, 1
      %s93 = scalar_select %p90, %s91, %s92
      %p96 = pneg %p90
      %p97 = scmp.eq.s32.totalorder %s13, 1
      %p98 = por %p96, %p97
      %p99 = scmp.ne.s32.totalorder %s91, %s94
      %p100 = scmp.eq.s32.totalorder %s13, 0
      %p101 = por %p99, %p100
      %p102 = scmp.ne.s32.totalorder %s91, %s94
      %p103 = scmp.eq.s32.totalorder %s18, 1
      %p104 = por %p102, %p103
      %p105 = scmp.ne.s32.totalorder %s94, %s95
      %p106 = scmp.eq.s32.totalorder %s18, 0
      %p107 = por %p105, %p106
      %p108 = scmp.ne.s32.totalorder %s94, %s95
      %p109 = scmp.eq.s32.totalorder %s19, 1
      %p110 = por %p108, %p109
      %p112 = scmp.ne.s32.totalorder %s95, %s111
      %p113 = scmp.eq.s32.totalorder %s19, 0
      %p114 = por %p112, %p113
      %s116 = sadd.s32 %s115, 1
      %p119 = scmp.eq.s32.totalorder %s13, 1
      %p120 = scmp.ne.s32.totalorder %s115, %s117
      %p121 = scmp.eq.s32.totalorder %s13, 0
      %p122 = por %p120, %p121
      %p123 = scmp.ne.s32.totalorder %s115, %s117
      %p124 = scmp.eq.s32.totalorder %s18, 1
      %p125 = por %p123, %p124
      %p126 = scmp.ne.s32.totalorder %s117, %s118
      %p127 = scmp.eq.s32.totalorder %s18, 0
      %p128 = por %p126, %p127
      %p129 = scmp.ne.s32.totalorder %s117, %s118
      %p130 = scmp.eq.s32.totalorder %s19, 1
      %p131 = por %p129, %p130
      %p133 = scmp.ne.s32.totalorder %s118, %s132
      %p134 = scmp.eq.s32.totalorder %s19, 0
      %p135 = por %p133, %p134
      %p136 = scmp.le.s32.totalorder 1, %s13
      %p137 = scmp.lt.s32.totalorder %s13, 3
      %p138 = pnand %p136, %p137
      %p139 = pneg %p138
      // Predicated region
      $region9: #{tpu_custom_call.1} parent=5 // pred_check
        _
      $region10: #{tpu_custom_call.1} parent=5 // pred_check_branch
        %141 = sbr.rel (%p138) target = $region12
      $region11: #{tpu_custom_call.1} parent=5 // pred_region
        %s142 = ssub.s32 %s13, 1
        // Predicated region
        $region13: #{tpu_custom_call.1} parent=11 // pred_check
          %p143 = pneg %p34
        $region14: #{tpu_custom_call.1} parent=11 // pred_check_branch
          %145 = sbr.rel (%p143) target = $region16
        $region15: #{tpu_custom_call.1} parent=11 // pred_region
          %s147 = ssub.s32 4096, 4096
          %148 = vsyncadd [#allocation3], %s147
          %s149 = sshll.u32 [#allocation2], 4
          %s150 = int_to_ptr.vmem [resolvable:$true] %s149
          %155 = dma.hbm_to_vmem [thread:$0]  %s0, 4096, %s150, [#allocation3], 128, 128, 8
        $region16: #{tpu_custom_call.1} parent=11 // pred_fallthru
          _
        // Predicated region
        $region17: #{tpu_custom_call.1} parent=11 // pred_check
          %p156 = pneg %p55
        $region18: #{tpu_custom_call.1} parent=11 // pred_check_branch
          %158 = sbr.rel (%p156) target = $region20
        $region19: #{tpu_custom_call.1} parent=11 // pred_region
          %s160 = ssub.s32 4096, 4096
          %161 = vsyncadd [#allocation6], %s160
          %s162 = sshll.u32 [#allocation5], 4
          %s163 = int_to_ptr.vmem [resolvable:$true] %s162
          %168 = dma.hbm_to_vmem [thread:$0]  %s1, 4096, %s163, [#allocation6], 128, 128, 8
        $region20: #{tpu_custom_call.1} parent=11 // pred_fallthru
          _
      $region12: #{tpu_custom_call.1} parent=5 // pred_fallthru
        _
      %p169 = scmp.lt.s32.totalorder %s13, 2
      // Predicated region
      $region21: #{tpu_custom_call.1} parent=5 // pred_check
        %p170 = pneg %p169
      $region22: #{tpu_custom_call.1} parent=5 // pred_check_branch
        %172 = sbr.rel (%p170) target = $region24
      $region23: #{tpu_custom_call.1} parent=5 // pred_region
        // Predicated region
        $region25: #{tpu_custom_call.1} parent=23 // pred_check
          %p173 = pneg %p75
        $region26: #{tpu_custom_call.1} parent=23 // pred_check_branch
          %175 = sbr.rel (%p173) target = $region28
        $region27: #{tpu_custom_call.1} parent=23 // pred_region
          %s176 = sand.u32 %s13, 1
          %s177 = scalar_lea.sflag [#allocation3], %s176
          %s178 = sand.u32 %s65, 1
          %s179 = smul.addr %s178, 64
          %s180 = scalar_lea.vmem [#allocation7], %s179
          %s182 = ssub.s32 1024, 1024
          %183 = vsyncadd %s177, %s182
          %s184 = smul.addr %s13, 16
          %s185 = smul.addr %s184, 64
          %s186 = scalar_lea.hbm %s2, %s185
          %s187 = sshll.u32 %s180, 4
          %s188 = int_to_ptr.vmem [resolvable:$true] %s187
          %193 = dma.hbm_to_vmem [thread:$0]  %s186, 1024, %s188, %s177, 64, 64, 4
        $region28: #{tpu_custom_call.1} parent=23 // pred_fallthru
          _
        // Predicated region
        $region29: #{tpu_custom_call.1} parent=23 // pred_check
          %p194 = pneg %p101
        $region30: #{tpu_custom_call.1} parent=23 // pred_check_branch
          %196 = sbr.rel (%p194) target = $region32
        $region31: #{tpu_custom_call.1} parent=23 // pred_region
          %p197 = scmp.lt.s32.totalorder %s13, 1
          %s198 = scalar_select %p197, %s13, 1
          %s199 = scalar_lea.vmem %s3, %s198
        $region32: #{tpu_custom_call.1} parent=23 // pred_fallthru
          _
      $region24: #{tpu_custom_call.1} parent=5 // pred_fallthru
        _
      %p200 = scmp.le.s32.totalorder 1, %s13
      %p201 = scmp.lt.s32.totalorder %s13, 3
      %p202 = pnand %p200, %p201
      %p203 = pneg %p202
      // Predicated region
      $region33: #{tpu_custom_call.1} parent=5 // pred_check
        _
      $region34: #{tpu_custom_call.1} parent=5 // pred_check_branch
        %205 = sbr.rel (%p202) target = $region36
      $region35: #{tpu_custom_call.1} parent=5 // pred_region
        %s206 = ssub.s32 %s13, 1
        // Predicated region
        $region37: #{tpu_custom_call.1} parent=35 // pred_check
          %p207 = pneg %p34
        $region38: #{tpu_custom_call.1} parent=35 // pred_check_branch
          %209 = sbr.rel (%p207) target = $region40
        $region39: #{tpu_custom_call.1} parent=35 // pred_region
          %210 = dma.done [#allocation3], 4096
        $region40: #{tpu_custom_call.1} parent=35 // pred_fallthru
          _
        // Predicated region
        $region41: #{tpu_custom_call.1} parent=35 // pred_check
          %p211 = pneg %p55
        $region42: #{tpu_custom_call.1} parent=35 // pred_check_branch
          %213 = sbr.rel (%p211) target = $region44
        $region43: #{tpu_custom_call.1} parent=35 // pred_region
          %214 = dma.done [#allocation6], 4096
        $region44: #{tpu_custom_call.1} parent=35 // pred_fallthru
          _
        %s215 = sand.u32 %s18, 1
        %s216 = scalar_lea.sflag [#allocation3], %s215
        %s217 = sand.u32 %s68, 1
        %s218 = smul.addr %s217, 64
        %s219 = scalar_lea.vmem [#allocation7], %s218
        // Predicated region
        $region45: #{tpu_custom_call.1} parent=35 // pred_check
          %p220 = pneg %p81
        $region46: #{tpu_custom_call.1} parent=35 // pred_check_branch
          %222 = sbr.rel (%p220) target = $region48
        $region47: #{tpu_custom_call.1} parent=35 // pred_region
          %223 = dma.done %s216, 1024
        $region48: #{tpu_custom_call.1} parent=35 // pred_fallthru
          _
        %p224 = pneg %p34
        %p225 = pneg %p31
        %p226 = pneg %p55
        %p227 = pneg %p52
        %s228 = sand.u32 %s18, 1
        %s229 = scalar_lea.sflag [#allocation3], %s228
        %s230 = sand.u32 %s68, 1
        %s231 = smul.addr %s230, 64
        %s232 = scalar_lea.vmem [#allocation7], %s231
        %p233 = pneg %p81
        %p234 = pneg %p78
        %p235 = scmp.lt.s32.totalorder %s18, 1
        %s236 = scalar_select %p235, %s18, 1
        %s237 = scalar_lea.vmem %s3, %s236
        %p238 = pneg %p107
        %p239 = pneg %p104
        %p240 = pneg %p128
        %p241 = pneg %p125
        %p242 = scmp.lt.s32.totalorder %s18, 1
        %s243 = scalar_select %p242, %s18, 1
        %s244 = scalar_lea.vmem %s3, %s243
        %p246 = scmp.eq.s32.totalorder %s18, 0
        // Predicated region
        $region49: #{tpu_custom_call.1} parent=35 // pred_check
          %p247 = pneg %p246
        $region50: #{tpu_custom_call.1} parent=35 // pred_check_branch
          %249 = sbr.rel (%p247) target = $region52
        $region51: #{tpu_custom_call.1} parent=35 // pred_region
          %v250 = vld [vmem:[#allocation5] sm:$0xff]
          %v251 = vld [vmem:[#allocation5 + $0x8] sm:$0xff]
          %v252 = vld [vmem:[#allocation5 + $0x10] sm:$0xff]
          %v253 = vld [vmem:[#allocation5 + $0x18] sm:$0xff]
          %v254 = vld [vmem:[#allocation5 + $0x20] sm:$0xff]
          %v255 = vld [vmem:[#allocation5 + $0x28] sm:$0xff]
          %v256 = vld [vmem:[#allocation5 + $0x30] sm:$0xff]
          %v257 = vld [vmem:[#allocation5 + $0x38] sm:$0xff]
          %v258 = vld [vmem:[#allocation5 + $0x40] sm:$0xff]
          %v259 = vld [vmem:[#allocation5 + $0x48] sm:$0xff]
          %v260 = vld [vmem:[#allocation5 + $0x50] sm:$0xff]
          %v261 = vld [vmem:[#allocation5 + $0x58] sm:$0xff]
          %v262 = vld [vmem:[#allocation5 + $0x60] sm:$0xff]
          %v263 = vld [vmem:[#allocation5 + $0x68] sm:$0xff]
          %v264 = vld [vmem:[#allocation5 + $0x70] sm:$0xff]
          %v265 = vld [vmem:[#allocation5 + $0x78] sm:$0xff]
          %v266 = vld [vmem:[#allocation5 + $0x80] sm:$0xff]
          %v267 = vld [vmem:[#allocation5 + $0x88] sm:$0xff]
          %v268 = vld [vmem:[#allocation5 + $0x90] sm:$0xff]
          %v269 = vld [vmem:[#allocation5 + $0x98] sm:$0xff]
          %v270 = vld [vmem:[#allocation5 + $0xa0] sm:$0xff]
          %v271 = vld [vmem:[#allocation5 + $0xa8] sm:$0xff]
          %v272 = vld [vmem:[#allocation5 + $0xb0] sm:$0xff]
          %v273 = vld [vmem:[#allocation5 + $0xb8] sm:$0xff]
          %v274 = vld [vmem:[#allocation5 + $0xc0] sm:$0xff]
          %v275 = vld [vmem:[#allocation5 + $0xc8] sm:$0xff]
          %v276 = vld [vmem:[#allocation5 + $0xd0] sm:$0xff]
          %v277 = vld [vmem:[#allocation5 + $0xd8] sm:$0xff]
          %v278 = vld [vmem:[#allocation5 + $0xe0] sm:$0xff]
          %v279 = vld [vmem:[#allocation5 + $0xe8] sm:$0xff]
          %v280 = vld [vmem:[#allocation5 + $0xf0] sm:$0xff]
          %v281 = vld [vmem:[#allocation5 + $0xf8] sm:$0xff]
          %282 = vst [vmem:[#allocation8] sm:$0xff] %v250
          %283 = vst [vmem:[#allocation8 + $0x8] sm:$0xff] %v251
          %284 = vst [vmem:[#allocation8 + $0x10] sm:$0xff] %v252
          %285 = vst [vmem:[#allocation8 + $0x18] sm:$0xff] %v253
          %286 = vst [vmem:[#allocation8 + $0x20] sm:$0xff] %v254
          %287 = vst [vmem:[#allocation8 + $0x28] sm:$0xff] %v255
          %288 = vst [vmem:[#allocation8 + $0x30] sm:$0xff] %v256
          %289 = vst [vmem:[#allocation8 + $0x38] sm:$0xff] %v257
          %290 = vst [vmem:[#allocation8 + $0x40] sm:$0xff] %v258
          %291 = vst [vmem:[#allocation8 + $0x48] sm:$0xff] %v259
          %292 = vst [vmem:[#allocation8 + $0x50] sm:$0xff] %v260
          %293 = vst [vmem:[#allocation8 + $0x58] sm:$0xff] %v261
          %294 = vst [vmem:[#allocation8 + $0x60] sm:$0xff] %v262
          %295 = vst [vmem:[#allocation8 + $0x68] sm:$0xff] %v263
          %296 = vst [vmem:[#allocation8 + $0x70] sm:$0xff] %v264
          %297 = vst [vmem:[#allocation8 + $0x78] sm:$0xff] %v265
          %298 = vst [vmem:[#allocation8 + $0x80] sm:$0xff] %v266
          %299 = vst [vmem:[#allocation8 + $0x88] sm:$0xff] %v267
          %300 = vst [vmem:[#allocation8 + $0x90] sm:$0xff] %v268
          %301 = vst [vmem:[#allocation8 + $0x98] sm:$0xff] %v269
          %302 = vst [vmem:[#allocation8 + $0xa0] sm:$0xff] %v270
          %303 = vst [vmem:[#allocation8 + $0xa8] sm:$0xff] %v271
          %304 = vst [vmem:[#allocation8 + $0xb0] sm:$0xff] %v272
          %305 = vst [vmem:[#allocation8 + $0xb8] sm:$0xff] %v273
          %306 = vst [vmem:[#allocation8 + $0xc0] sm:$0xff] %v274
          %307 = vst [vmem:[#allocation8 + $0xc8] sm:$0xff] %v275
          %308 = vst [vmem:[#allocation8 + $0xd0] sm:$0xff] %v276
          %309 = vst [vmem:[#allocation8 + $0xd8] sm:$0xff] %v277
          %310 = vst [vmem:[#allocation8 + $0xe0] sm:$0xff] %v278
          %311 = vst [vmem:[#allocation8 + $0xe8] sm:$0xff] %v279
          %312 = vst [vmem:[#allocation8 + $0xf0] sm:$0xff] %v280
          %313 = vst [vmem:[#allocation8 + $0xf8] sm:$0xff] %v281
        $region52: #{tpu_custom_call.1} parent=35 // pred_fallthru
          _
        %v314 = vld [vmem:[#allocation8] sm:$0xff]
        %v315 = vld [vmem:[#allocation8 + $0x8] sm:$0xff]
        %v316 = vld [vmem:[#allocation8 + $0x10] sm:$0xff]
        %v317 = vld [vmem:[#allocation8 + $0x18] sm:$0xff]
        %v318 = vld [vmem:[#allocation8 + $0x20] sm:$0xff]
        %v319 = vld [vmem:[#allocation8 + $0x28] sm:$0xff]
        %v320 = vld [vmem:[#allocation8 + $0x30] sm:$0xff]
        %v321 = vld [vmem:[#allocation8 + $0x38] sm:$0xff]
        %v322 = vld [vmem:[#allocation8 + $0x40] sm:$0xff]
        %v323 = vld [vmem:[#allocation8 + $0x48] sm:$0xff]
        %v324 = vld [vmem:[#allocation8 + $0x50] sm:$0xff]
        %v325 = vld [vmem:[#allocation8 + $0x58] sm:$0xff]
        %v326 = vld [vmem:[#allocation8 + $0x60] sm:$0xff]
        %v327 = vld [vmem:[#allocation8 + $0x68] sm:$0xff]
        %v328 = vld [vmem:[#allocation8 + $0x70] sm:$0xff]
        %v329 = vld [vmem:[#allocation8 + $0x78] sm:$0xff]
        %v330 = vld [vmem:[#allocation8 + $0x80] sm:$0xff]
        %v331 = vld [vmem:[#allocation8 + $0x88] sm:$0xff]
        %v332 = vld [vmem:[#allocation8 + $0x90] sm:$0xff]
        %v333 = vld [vmem:[#allocation8 + $0x98] sm:$0xff]
        %v334 = vld [vmem:[#allocation8 + $0xa0] sm:$0xff]
        %v335 = vld [vmem:[#allocation8 + $0xa8] sm:$0xff]
        %v336 = vld [vmem:[#allocation8 + $0xb0] sm:$0xff]
        %v337 = vld [vmem:[#allocation8 + $0xb8] sm:$0xff]
        %v338 = vld [vmem:[#allocation8 + $0xc0] sm:$0xff]
        %v339 = vld [vmem:[#allocation8 + $0xc8] sm:$0xff]
        %v340 = vld [vmem:[#allocation8 + $0xd0] sm:$0xff]
        %v341 = vld [vmem:[#allocation8 + $0xd8] sm:$0xff]
        %v342 = vld [vmem:[#allocation8 + $0xe0] sm:$0xff]
        %v343 = vld [vmem:[#allocation8 + $0xe8] sm:$0xff]
        %v344 = vld [vmem:[#allocation8 + $0xf0] sm:$0xff]
        %v345 = vld [vmem:[#allocation8 + $0xf8] sm:$0xff]
        %v346 = vpack.c.bf16 %v315, %v314
        %v347 = vpack.c.bf16 %v317, %v316
        %v348 = vpack.c.bf16 %v319, %v318
        %v349 = vpack.c.bf16 %v321, %v320
        %v350 = vpack.c.bf16 %v323, %v322
        %v351 = vpack.c.bf16 %v325, %v324
        %v352 = vpack.c.bf16 %v327, %v326
        %v353 = vpack.c.bf16 %v329, %v328
        %v354 = vpack.c.bf16 %v331, %v330
        %v355 = vpack.c.bf16 %v333, %v332
        %v356 = vpack.c.bf16 %v335, %v334
        %v357 = vpack.c.bf16 %v337, %v336
        %v358 = vpack.c.bf16 %v339, %v338
        %v359 = vpack.c.bf16 %v341, %v340
        %v360 = vpack.c.bf16 %v343, %v342
        %v361 = vpack.c.bf16 %v345, %v344
        %v362 = vld [vmem:[%s219] sm:$0xf]
        %v363 = vld [vmem:[%s219 + $0x4] sm:$0xf]
        %v364 = vld [vmem:[%s219 + $0x8] sm:$0xf]
        %v365 = vld [vmem:[%s219 + $0xc] sm:$0xf]
        %v366 = vld [vmem:[%s219 + $0x10] sm:$0xf]
        %v367 = vld [vmem:[%s219 + $0x14] sm:$0xf]
        %v368 = vld [vmem:[%s219 + $0x18] sm:$0xf]
        %v369 = vld [vmem:[%s219 + $0x1c] sm:$0xf]
        %v370 = vld [vmem:[%s219 + $0x20] sm:$0xf]
        %v371 = vld [vmem:[%s219 + $0x24] sm:$0xf]
        %v372 = vld [vmem:[%s219 + $0x28] sm:$0xf]
        %v373 = vld [vmem:[%s219 + $0x2c] sm:$0xf]
        %v374 = vld [vmem:[%s219 + $0x30] sm:$0xf]
        %v375 = vld [vmem:[%s219 + $0x34] sm:$0xf]
        %v376 = vld [vmem:[%s219 + $0x38] sm:$0xf]
        %v377 = vld [vmem:[%s219 + $0x3c] sm:$0xf]
        %v394 = vunpack.c.l.b16 %v362
        %v395 = vunpack.c.l.b16 %v363
        %v396 = vunpack.c.l.b16 %v364
        %v397 = vunpack.c.l.b16 %v365
        %v398 = vunpack.c.l.b16 %v366
        %v399 = vunpack.c.l.b16 %v367
        %v400 = vunpack.c.l.b16 %v368
        %v401 = vunpack.c.l.b16 %v369
        %v402 = vunpack.c.l.b16 %v370
        %v403 = vunpack.c.l.b16 %v371
        %v404 = vunpack.c.l.b16 %v372
        %v405 = vunpack.c.l.b16 %v373
        %v406 = vunpack.c.l.b16 %v374
        %v407 = vunpack.c.l.b16 %v375
        %v408 = vunpack.c.l.b16 %v376
        %v409 = vunpack.c.l.b16 %v377
        %v410 = vpack.c.b16 %v395, %v394
        %v411 = vpack.c.b16 %v397, %v396
        %v412 = vpack.c.b16 %v399, %v398
        %v413 = vpack.c.b16 %v401, %v400
        %v414 = vpack.c.b16 %v403, %v402
        %v415 = vpack.c.b16 %v405, %v404
        %v416 = vpack.c.b16 %v407, %v406
        %v417 = vpack.c.b16 %v409, %v408
        %426 = vmatprep.subr.bf16.mxu0 0
        %427 = vmatpush1.bf16.msra.mxu0 %v410
        %428 = vmatprep.subr.bf16.mxu0 0
        %429 = vmatpush1.bf16.msra.mxu0 %v411
        %430 = vmatprep.subr.bf16.mxu0 0
        %431 = vmatpush1.bf16.msra.mxu0 %v412
        %432 = vmatprep.subr.bf16.mxu0 0
        %433 = vmatpush1.bf16.msra.mxu0 %v413
        %434 = vmatprep.subr.bf16.mxu0 0
        %435 = vmatpush1.bf16.msra.mxu0 %v414
        %436 = vmatprep.subr.bf16.mxu0 0
        %437 = vmatpush1.bf16.msra.mxu0 %v415
        %438 = vmatprep.subr.bf16.mxu0 0
        %439 = vmatpush1.bf16.msra.mxu0 %v416
        %440 = vmatprep.subr.bf16.mxu0 0
        %441 = vmatpush1.bf16.msra.mxu0 %v417
        %442 = vmatprep.subr.bf16.mxu0 0
        %443 = vmatpush1.bf16.msra.mxu0 0
        %444 = vmatprep.subr.bf16.mxu0 0
        %445 = vmatpush1.bf16.msra.mxu0 0
        %446 = vmatprep.subr.bf16.mxu0 0
        %447 = vmatpush1.bf16.msra.mxu0 0
        %448 = vmatprep.subr.bf16.mxu0 0
        %449 = vmatpush1.bf16.msra.mxu0 0
        %450 = vmatprep.subr.bf16.mxu0 0
        %451 = vmatpush1.bf16.msra.mxu0 0
        %452 = vmatprep.subr.bf16.mxu0 0
        %453 = vmatpush1.bf16.msra.mxu0 0
        %454 = vmatprep.subr.bf16.mxu0 0
        %455 = vmatpush1.bf16.msra.mxu0 0
        %456 = vmatprep.subr.bf16.mxu0 0
        %457 = vmatpush1.bf16.msra.mxu0 0
        %458 = vmatprep.mubr.bf16.mxu0 0
        %459 = vmatmul.mubr.bf16.gmra.mrb[0].mxu0 %v346
        %v460 = vpop.f32.mrb[0].mxu0
        %v461 = vadd.f32 0.0, %v460
        %v462 = vpop.f32.mrb[0].mxu0
        %v463 = vpop.f32.mrb[0].mxu0
        %v464 = vadd.f32 0.0, %v463
        %v465 = vpop.f32.mrb[0].mxu0
        %466 = vmatprep.mubr.bf16.mxu0 0
        %467 = vmatmul.mubr.bf16.gmra.mrb[0].mxu0 %v347
        %v468 = vpop.f32.mrb[0].mxu0
        %v469 = vadd.f32 0.0, %v468
        %v470 = vpop.f32.mrb[0].mxu0
        %v471 = vpop.f32.mrb[0].mxu0
        %v472 = vadd.f32 0.0, %v471
        %v473 = vpop.f32.mrb[0].mxu0
        %474 = vmatprep.mubr.bf16.mxu0 0
        %475 = vmatmul.mubr.bf16.gmra.mrb[0].mxu0 %v348
        %v476 = vpop.f32.mrb[0].mxu0
        %v477 = vadd.f32 0.0, %v476
        %v478 = vpop.f32.mrb[0].mxu0
        %v479 = vpop.f32.mrb[0].mxu0
        %v480 = vadd.f32 0.0, %v479
        %v481 = vpop.f32.mrb[0].mxu0
        %482 = vmatprep.mubr.bf16.mxu0 0
        %483 = vmatmul.mubr.bf16.gmra.mrb[0].mxu0 %v349
        %v484 = vpop.f32.mrb[0].mxu0
        %v485 = vadd.f32 0.0, %v484
        %v486 = vpop.f32.mrb[0].mxu0
        %v487 = vpop.f32.mrb[0].mxu0
        %v488 = vadd.f32 0.0, %v487
        %v489 = vpop.f32.mrb[0].mxu0
        %490 = vmatprep.mubr.bf16.mxu0 0
        %491 = vmatmul.mubr.bf16.gmra.mrb[0].mxu0 %v350
        %v492 = vpop.f32.mrb[0].mxu0
        %v493 = vadd.f32 0.0, %v492
        %v494 = vpop.f32.mrb[0].mxu0
        %v495 = vpop.f32.mrb[0].mxu0
        %v496 = vadd.f32 0.0, %v495
        %v497 = vpop.f32.mrb[0].mxu0
        %498 = vmatprep.mubr.bf16.mxu0 0
        %499 = vmatmul.mubr.bf16.gmra.mrb[0].mxu0 %v351
        %v500 = vpop.f32.mrb[0].mxu0
        %v501 = vadd.f32 0.0, %v500
        %v502 = vpop.f32.mrb[0].mxu0
        %v503 = vpop.f32.mrb[0].mxu0
        %v504 = vadd.f32 0.0, %v503
        %v505 = vpop.f32.mrb[0].mxu0
        %506 = vmatprep.mubr.bf16.mxu0 0
        %507 = vmatmul.mubr.bf16.gmra.mrb[0].mxu0 %v352
        %v508 = vpop.f32.mrb[0].mxu0
        %v509 = vadd.f32 0.0, %v508
        %v510 = vpop.f32.mrb[0].mxu0
        %v511 = vpop.f32.mrb[0].mxu0
        %v512 = vadd.f32 0.0, %v511
        %v513 = vpop.f32.mrb[0].mxu0
        %514 = vmatprep.mubr.bf16.mxu0 0
        %515 = vmatmul.mubr.bf16.gmra.mrb[0].mxu0 %v353
        %v516 = vpop.f32.mrb[0].mxu0
        %v517 = vadd.f32 0.0, %v516
        %v518 = vpop.f32.mrb[0].mxu0
        %v519 = vpop.f32.mrb[0].mxu0
        %v520 = vadd.f32 0.0, %v519
        %v521 = vpop.f32.mrb[0].mxu0
        %522 = vmatprep.mubr.bf16.mxu0 0
        %523 = vmatmul.mubr.bf16.gmra.mrb[0].mxu0 %v354
        %v524 = vpop.f32.mrb[0].mxu0
        %v525 = vadd.f32 0.0, %v524
        %v526 = vpop.f32.mrb[0].mxu0
        %v527 = vpop.f32.mrb[0].mxu0
        %v528 = vadd.f32 0.0, %v527
        %v529 = vpop.f32.mrb[0].mxu0
        %530 = vmatprep.mubr.bf16.mxu0 0
        %531 = vmatmul.mubr.bf16.gmra.mrb[0].mxu0 %v355
        %v532 = vpop.f32.mrb[0].mxu0
        %v533 = vadd.f32 0.0, %v532
        %v534 = vpop.f32.mrb[0].mxu0
        %v535 = vpop.f32.mrb[0].mxu0
        %v536 = vadd.f32 0.0, %v535
        %v537 = vpop.f32.mrb[0].mxu0
        %538 = vmatprep.mubr.bf16.mxu0 0
        %539 = vmatmul.mubr.bf16.gmra.mrb[0].mxu0 %v356
        %v540 = vpop.f32.mrb[0].mxu0
        %v541 = vadd.f32 0.0, %v540
        %v542 = vpop.f32.mrb[0].mxu0
        %v543 = vpop.f32.mrb[0].mxu0
        %v544 = vadd.f32 0.0, %v543
        %v545 = vpop.f32.mrb[0].mxu0
        %546 = vmatprep.mubr.bf16.mxu0 0
        %547 = vmatmul.mubr.bf16.gmra.mrb[0].mxu0 %v357
        %v548 = vpop.f32.mrb[0].mxu0
        %v549 = vadd.f32 0.0, %v548
        %v550 = vpop.f32.mrb[0].mxu0
        %v551 = vpop.f32.mrb[0].mxu0
        %v552 = vadd.f32 0.0, %v551
        %v553 = vpop.f32.mrb[0].mxu0
        %554 = vmatprep.mubr.bf16.mxu0 0
        %555 = vmatmul.mubr.bf16.gmra.mrb[0].mxu0 %v358
        %v556 = vpop.f32.mrb[0].mxu0
        %v557 = vadd.f32 0.0, %v556
        %v558 = vpop.f32.mrb[0].mxu0
        %v559 = vpop.f32.mrb[0].mxu0
        %v560 = vadd.f32 0.0, %v559
        %v561 = vpop.f32.mrb[0].mxu0
        %562 = vmatprep.mubr.bf16.mxu0 0
        %563 = vmatmul.mubr.bf16.gmra.mrb[0].mxu0 %v359
        %v564 = vpop.f32.mrb[0].mxu0
        %v565 = vadd.f32 0.0, %v564
        %v566 = vpop.f32.mrb[0].mxu0
        %v567 = vpop.f32.mrb[0].mxu0
        %v568 = vadd.f32 0.0, %v567
        %v569 = vpop.f32.mrb[0].mxu0
        %570 = vmatprep.mubr.bf16.mxu0 0
        %571 = vmatmul.mubr.bf16.gmra.mrb[0].mxu0 %v360
        %v572 = vpop.f32.mrb[0].mxu0
        %v573 = vadd.f32 0.0, %v572
        %v574 = vpop.f32.mrb[0].mxu0
        %v575 = vpop.f32.mrb[0].mxu0
        %v576 = vadd.f32 0.0, %v575
        %v577 = vpop.f32.mrb[0].mxu0
        %578 = vmatprep.mubr.bf16.mxu0 0
        %579 = vmatmul.mubr.bf16.gmra.mrb[0].mxu0 %v361
        %v580 = vpop.f32.mrb[0].mxu0
        %v581 = vadd.f32 0.0, %v580
        %v582 = vpop.f32.mrb[0].mxu0
        %v583 = vpop.f32.mrb[0].mxu0
        %v584 = vadd.f32 0.0, %v583
        %v585 = vpop.f32.mrb[0].mxu0
        %586 = vdwg.mxu0
        %v587 = vld [vmem:[#allocation2] sm:$0xff]
        %v588 = vld [vmem:[#allocation2 + $0x8] sm:$0xff]
        %v589 = vld [vmem:[#allocation2 + $0x10] sm:$0xff]
        %v590 = vld [vmem:[#allocation2 + $0x18] sm:$0xff]
        %v591 = vld [vmem:[#allocation2 + $0x20] sm:$0xff]
        %v592 = vld [vmem:[#allocation2 + $0x28] sm:$0xff]
        %v593 = vld [vmem:[#allocation2 + $0x30] sm:$0xff]
        %v594 = vld [vmem:[#allocation2 + $0x38] sm:$0xff]
        %v595 = vld [vmem:[#allocation2 + $0x40] sm:$0xff]
        %v596 = vld [vmem:[#allocation2 + $0x48] sm:$0xff]
        %v597 = vld [vmem:[#allocation2 + $0x50] sm:$0xff]
        %v598 = vld [vmem:[#allocation2 + $0x58] sm:$0xff]
        %v599 = vld [vmem:[#allocation2 + $0x60] sm:$0xff]
        %v600 = vld [vmem:[#allocation2 + $0x68] sm:$0xff]
        %v601 = vld [vmem:[#allocation2 + $0x70] sm:$0xff]
        %v602 = vld [vmem:[#allocation2 + $0x78] sm:$0xff]
        %v603 = vld [vmem:[#allocation2 + $0x80] sm:$0xff]
        %v604 = vld [vmem:[#allocation2 + $0x88] sm:$0xff]
        %v605 = vld [vmem:[#allocation2 + $0x90] sm:$0xff]
        %v606 = vld [vmem:[#allocation2 + $0x98] sm:$0xff]
        %v607 = vld [vmem:[#allocation2 + $0xa0] sm:$0xff]
        %v608 = vld [vmem:[#allocation2 + $0xa8] sm:$0xff]
        %v609 = vld [vmem:[#allocation2 + $0xb0] sm:$0xff]
        %v610 = vld [vmem:[#allocation2 + $0xb8] sm:$0xff]
        %v611 = vld [vmem:[#allocation2 + $0xc0] sm:$0xff]
        %v612 = vld [vmem:[#allocation2 + $0xc8] sm:$0xff]
        %v613 = vld [vmem:[#allocation2 + $0xd0] sm:$0xff]
        %v614 = vld [vmem:[#allocation2 + $0xd8] sm:$0xff]
        %v615 = vld [vmem:[#allocation2 + $0xe0] sm:$0xff]
        %v616 = vld [vmem:[#allocation2 + $0xe8] sm:$0xff]
        %v617 = vld [vmem:[#allocation2 + $0xf0] sm:$0xff]
        %v618 = vld [vmem:[#allocation2 + $0xf8] sm:$0xff]
        %v619 = vpack.c.bf16 %v464, %v461
        %v620 = vpack.c.bf16 %v472, %v469
        %v621 = vpack.c.bf16 %v480, %v477
        %v622 = vpack.c.bf16 %v488, %v485
        %v623 = vpack.c.bf16 %v496, %v493
        %v624 = vpack.c.bf16 %v504, %v501
        %v625 = vpack.c.bf16 %v512, %v509
        %v626 = vpack.c.bf16 %v520, %v517
        %v627 = vpack.c.bf16 %v528, %v525
        %v628 = vpack.c.bf16 %v536, %v533
        %v629 = vpack.c.bf16 %v544, %v541
        %v630 = vpack.c.bf16 %v552, %v549
        %v631 = vpack.c.bf16 %v560, %v557
        %v632 = vpack.c.bf16 %v568, %v565
        %v633 = vpack.c.bf16 %v576, %v573
        %v634 = vpack.c.bf16 %v584, %v581
        %v635 = vld [vmem:[%s244] sm:$0x1]
        %v637 = vlaneseq
        %v638 = vshrl.u32 %v637, 7
        %v639 = vsub.s32 0, %v638
        %v640 = vrot.slane %v635, %v639
        %v674 = vunpack.c.l.b16 %v587
        %v675 = vunpack.c.h.b16 %v587
        %v676 = vunpack.c.l.b16 %v588
        %v677 = vunpack.c.h.b16 %v588
        %v678 = vunpack.c.l.b16 %v589
        %v679 = vunpack.c.h.b16 %v589
        %v680 = vunpack.c.l.b16 %v590
        %v681 = vunpack.c.h.b16 %v590
        %v682 = vunpack.c.l.b16 %v591
        %v683 = vunpack.c.h.b16 %v591
        %v684 = vunpack.c.l.b16 %v592
        %v685 = vunpack.c.h.b16 %v592
        %v686 = vunpack.c.l.b16 %v593
        %v687 = vunpack.c.h.b16 %v593
        %v688 = vunpack.c.l.b16 %v594
        %v689 = vunpack.c.h.b16 %v594
        %v690 = vunpack.c.l.b16 %v595
        %v691 = vunpack.c.h.b16 %v595
        %v692 = vunpack.c.l.b16 %v596
        %v693 = vunpack.c.h.b16 %v596
        %v694 = vunpack.c.l.b16 %v597
        %v695 = vunpack.c.h.b16 %v597
        %v696 = vunpack.c.l.b16 %v598
        %v697 = vunpack.c.h.b16 %v598
        %v698 = vunpack.c.l.b16 %v599
        %v699 = vunpack.c.h.b16 %v599
        %v700 = vunpack.c.l.b16 %v600
        %v701 = vunpack.c.h.b16 %v600
        %v702 = vunpack.c.l.b16 %v601
        %v703 = vunpack.c.h.b16 %v601
        %v704 = vunpack.c.l.b16 %v602
        %v705 = vunpack.c.h.b16 %v602
        %v706 = vunpack.c.l.b16 %v603
        %v707 = vunpack.c.h.b16 %v603
        %v708 = vunpack.c.l.b16 %v604
        %v709 = vunpack.c.h.b16 %v604
        %v710 = vunpack.c.l.b16 %v605
        %v711 = vunpack.c.h.b16 %v605
        %v712 = vunpack.c.l.b16 %v606
        %v713 = vunpack.c.h.b16 %v606
        %v714 = vunpack.c.l.b16 %v607
        %v715 = vunpack.c.h.b16 %v607
        %v716 = vunpack.c.l.b16 %v608
        %v717 = vunpack.c.h.b16 %v608
        %v718 = vunpack.c.l.b16 %v609
        %v719 = vunpack.c.h.b16 %v609
        %v720 = vunpack.c.l.b16 %v610
        %v721 = vunpack.c.h.b16 %v610
        %v722 = vunpack.c.l.b16 %v611
        %v723 = vunpack.c.h.b16 %v611
        %v724 = vunpack.c.l.b16 %v612
        %v725 = vunpack.c.h.b16 %v612
        %v726 = vunpack.c.l.b16 %v613
        %v727 = vunpack.c.h.b16 %v613
        %v728 = vunpack.c.l.b16 %v614
        %v729 = vunpack.c.h.b16 %v614
        %v730 = vunpack.c.l.b16 %v615
        %v731 = vunpack.c.h.b16 %v615
        %v732 = vunpack.c.l.b16 %v616
        %v733 = vunpack.c.h.b16 %v616
        %v734 = vunpack.c.l.b16 %v617
        %v735 = vunpack.c.h.b16 %v617
        %v736 = vunpack.c.l.b16 %v618
        %v737 = vunpack.c.h.b16 %v618
        %v738 = vpack.c.b16 %v676, %v674
        %v739 = vpack.c.b16 %v677, %v675
        %v740 = vpack.c.b16 %v680, %v678
        %v741 = vpack.c.b16 %v681, %v679
        %v742 = vpack.c.b16 %v684, %v682
        %v743 = vpack.c.b16 %v685, %v683
        %v744 = vpack.c.b16 %v688, %v686
        %v745 = vpack.c.b16 %v689, %v687
        %v746 = vpack.c.b16 %v692, %v690
        %v747 = vpack.c.b16 %v693, %v691
        %v748 = vpack.c.b16 %v696, %v694
        %v749 = vpack.c.b16 %v697, %v695
        %v750 = vpack.c.b16 %v700, %v698
        %v751 = vpack.c.b16 %v701, %v699
        %v752 = vpack.c.b16 %v704, %v702
        %v753 = vpack.c.b16 %v705, %v703
        %v754 = vpack.c.b16 %v708, %v706
        %v755 = vpack.c.b16 %v709, %v707
        %v756 = vpack.c.b16 %v712, %v710
        %v757 = vpack.c.b16 %v713, %v711
        %v758 = vpack.c.b16 %v716, %v714
        %v759 = vpack.c.b16 %v717, %v715
        %v760 = vpack.c.b16 %v720, %v718
        %v761 = vpack.c.b16 %v721, %v719
        %v762 = vpack.c.b16 %v724, %v722
        %v763 = vpack.c.b16 %v725, %v723
        %v764 = vpack.c.b16 %v728, %v726
        %v765 = vpack.c.b16 %v729, %v727
        %v766 = vpack.c.b16 %v732, %v730
        %v767 = vpack.c.b16 %v733, %v731
        %v768 = vpack.c.b16 %v736, %v734
        %v769 = vpack.c.b16 %v737, %v735
        %802 = vmatprep.subr.bf16.mxu0 0
        %803 = vmatpush1.bf16.msra.mxu0 %v619
        %804 = vmatprep.subr.bf16.mxu0 0
        %805 = vmatpush1.bf16.msra.mxu0 %v620
        %806 = vmatprep.subr.bf16.mxu0 0
        %807 = vmatpush1.bf16.msra.mxu0 %v621
        %808 = vmatprep.subr.bf16.mxu0 0
        %809 = vmatpush1.bf16.msra.mxu0 %v622
        %810 = vmatprep.subr.bf16.mxu0 0
        %811 = vmatpush1.bf16.msra.mxu0 %v623
        %812 = vmatprep.subr.bf16.mxu0 0
        %813 = vmatpush1.bf16.msra.mxu0 %v624
        %814 = vmatprep.subr.bf16.mxu0 0
        %815 = vmatpush1.bf16.msra.mxu0 %v625
        %816 = vmatprep.subr.bf16.mxu0 0
        %817 = vmatpush1.bf16.msra.mxu0 %v626
        %818 = vmatprep.subr.bf16.mxu0 0
        %819 = vmatpush1.bf16.msra.mxu0 %v627
        %820 = vmatprep.subr.bf16.mxu0 0
        %821 = vmatpush1.bf16.msra.mxu0 %v628
        %822 = vmatprep.subr.bf16.mxu0 0
        %823 = vmatpush1.bf16.msra.mxu0 %v629
        %824 = vmatprep.subr.bf16.mxu0 0
        %825 = vmatpush1.bf16.msra.mxu0 %v630
        %826 = vmatprep.subr.bf16.mxu0 0
        %827 = vmatpush1.bf16.msra.mxu0 %v631
        %828 = vmatprep.subr.bf16.mxu0 0
        %829 = vmatpush1.bf16.msra.mxu0 %v632
        %830 = vmatprep.subr.bf16.mxu0 0
        %831 = vmatpush1.bf16.msra.mxu0 %v633
        %832 = vmatprep.subr.bf16.mxu0 0
        %833 = vmatpush1.bf16.msra.mxu0 %v634
        %834 = vmatprep.mubr.bf16.mxu0 %v739
        %835 = vmatmul.mubr.bf16.gmra.mrb[0].mxu0 %v738
        %v836 = vpop.f32.mrb[0].mxu0
        %v837 = vadd.f32 %v640, %v836
        %v838 = vpop.f32.mrb[0].mxu0
        %v839 = vpop.f32.mrb[0].mxu0
        %v840 = vadd.f32 %v640, %v839
        %v841 = vpop.f32.mrb[0].mxu0
        %842 = vmatprep.mubr.bf16.mxu0 %v741
        %843 = vmatmul.mubr.bf16.gmra.mrb[0].mxu0 %v740
        %v844 = vpop.f32.mrb[0].mxu0
        %v845 = vadd.f32 %v640, %v844
        %v846 = vpop.f32.mrb[0].mxu0
        %v847 = vpop.f32.mrb[0].mxu0
        %v848 = vadd.f32 %v640, %v847
        %v849 = vpop.f32.mrb[0].mxu0
        %850 = vmatprep.mubr.bf16.mxu0 %v743
        %851 = vmatmul.mubr.bf16.gmra.mrb[0].mxu0 %v742
        %v852 = vpop.f32.mrb[0].mxu0
        %v853 = vadd.f32 %v640, %v852
        %v854 = vpop.f32.mrb[0].mxu0
        %v855 = vpop.f32.mrb[0].mxu0
        %v856 = vadd.f32 %v640, %v855
        %v857 = vpop.f32.mrb[0].mxu0
        %858 = vmatprep.mubr.bf16.mxu0 %v745
        %859 = vmatmul.mubr.bf16.gmra.mrb[0].mxu0 %v744
        %v860 = vpop.f32.mrb[0].mxu0
        %v861 = vadd.f32 %v640, %v860
        %v862 = vpop.f32.mrb[0].mxu0
        %v863 = vpop.f32.mrb[0].mxu0
        %v864 = vadd.f32 %v640, %v863
        %v865 = vpop.f32.mrb[0].mxu0
        %866 = vmatprep.mubr.bf16.mxu0 %v747
        %867 = vmatmul.mubr.bf16.gmra.mrb[0].mxu0 %v746
        %v868 = vpop.f32.mrb[0].mxu0
        %v869 = vadd.f32 %v640, %v868
        %v870 = vpop.f32.mrb[0].mxu0
        %v871 = vpop.f32.mrb[0].mxu0
        %v872 = vadd.f32 %v640, %v871
        %v873 = vpop.f32.mrb[0].mxu0
        %874 = vmatprep.mubr.bf16.mxu0 %v749
        %875 = vmatmul.mubr.bf16.gmra.mrb[0].mxu0 %v748
        %v876 = vpop.f32.mrb[0].mxu0
        %v877 = vadd.f32 %v640, %v876
        %v878 = vpop.f32.mrb[0].mxu0
        %v879 = vpop.f32.mrb[0].mxu0
        %v880 = vadd.f32 %v640, %v879
        %v881 = vpop.f32.mrb[0].mxu0
        %882 = vmatprep.mubr.bf16.mxu0 %v751
        %883 = vmatmul.mubr.bf16.gmra.mrb[0].mxu0 %v750
        %v884 = vpop.f32.mrb[0].mxu0
        %v885 = vadd.f32 %v640, %v884
        %v886 = vpop.f32.mrb[0].mxu0
        %v887 = vpop.f32.mrb[0].mxu0
        %v888 = vadd.f32 %v640, %v887
        %v889 = vpop.f32.mrb[0].mxu0
        %890 = vmatprep.mubr.bf16.mxu0 %v753
        %891 = vmatmul.mubr.bf16.gmra.mrb[0].mxu0 %v752
        %v892 = vpop.f32.mrb[0].mxu0
        %v893 = vadd.f32 %v640, %v892
        %v894 = vpop.f32.mrb[0].mxu0
        %v895 = vpop.f32.mrb[0].mxu0
        %v896 = vadd.f32 %v640, %v895
        %v897 = vpop.f32.mrb[0].mxu0
        %898 = vmatprep.mubr.bf16.mxu0 %v755
        %899 = vmatmul.mubr.bf16.gmra.mrb[0].mxu0 %v754
        %v900 = vpop.f32.mrb[0].mxu0
        %v901 = vadd.f32 %v640, %v900
        %v902 = vpop.f32.mrb[0].mxu0
        %v903 = vpop.f32.mrb[0].mxu0
        %v904 = vadd.f32 %v640, %v903
        %v905 = vpop.f32.mrb[0].mxu0
        %906 = vmatprep.mubr.bf16.mxu0 %v757
        %907 = vmatmul.mubr.bf16.gmra.mrb[0].mxu0 %v756
        %v908 = vpop.f32.mrb[0].mxu0
        %v909 = vadd.f32 %v640, %v908
        %v910 = vpop.f32.mrb[0].mxu0
        %v911 = vpop.f32.mrb[0].mxu0
        %v912 = vadd.f32 %v640, %v911
        %v913 = vpop.f32.mrb[0].mxu0
        %914 = vmatprep.mubr.bf16.mxu0 %v759
        %915 = vmatmul.mubr.bf16.gmra.mrb[0].mxu0 %v758
        %v916 = vpop.f32.mrb[0].mxu0
        %v917 = vadd.f32 %v640, %v916
        %v918 = vpop.f32.mrb[0].mxu0
        %v919 = vpop.f32.mrb[0].mxu0
        %v920 = vadd.f32 %v640, %v919
        %v921 = vpop.f32.mrb[0].mxu0
        %922 = vmatprep.mubr.bf16.mxu0 %v761
        %923 = vmatmul.mubr.bf16.gmra.mrb[0].mxu0 %v760
        %v924 = vpop.f32.mrb[0].mxu0
        %v925 = vadd.f32 %v640, %v924
        %v926 = vpop.f32.mrb[0].mxu0
        %v927 = vpop.f32.mrb[0].mxu0
        %v928 = vadd.f32 %v640, %v927
        %v929 = vpop.f32.mrb[0].mxu0
        %930 = vmatprep.mubr.bf16.mxu0 %v763
        %931 = vmatmul.mubr.bf16.gmra.mrb[0].mxu0 %v762
        %v932 = vpop.f32.mrb[0].mxu0
        %v933 = vadd.f32 %v640, %v932
        %v934 = vpop.f32.mrb[0].mxu0
        %v935 = vpop.f32.mrb[0].mxu0
        %v936 = vadd.f32 %v640, %v935
        %v937 = vpop.f32.mrb[0].mxu0
        %938 = vmatprep.mubr.bf16.mxu0 %v765
        %939 = vmatmul.mubr.bf16.gmra.mrb[0].mxu0 %v764
        %v940 = vpop.f32.mrb[0].mxu0
        %v941 = vadd.f32 %v640, %v940
        %v942 = vpop.f32.mrb[0].mxu0
        %v943 = vpop.f32.mrb[0].mxu0
        %v944 = vadd.f32 %v640, %v943
        %v945 = vpop.f32.mrb[0].mxu0
        %946 = vmatprep.mubr.bf16.mxu0 %v767
        %947 = vmatmul.mubr.bf16.gmra.mrb[0].mxu0 %v766
        %v948 = vpop.f32.mrb[0].mxu0
        %v949 = vadd.f32 %v640, %v948
        %v950 = vpop.f32.mrb[0].mxu0
        %v951 = vpop.f32.mrb[0].mxu0
        %v952 = vadd.f32 %v640, %v951
        %v953 = vpop.f32.mrb[0].mxu0
        %954 = vmatprep.mubr.bf16.mxu0 %v769
        %955 = vmatmul.mubr.bf16.gmra.mrb[0].mxu0 %v768
        %v956 = vpop.f32.mrb[0].mxu0
        %v957 = vadd.f32 %v640, %v956
        %v958 = vpop.f32.mrb[0].mxu0
        %v959 = vpop.f32.mrb[0].mxu0
        %v960 = vadd.f32 %v640, %v959
        %v961 = vpop.f32.mrb[0].mxu0
        %962 = vdwg.mxu0
        %v963 = vmax.f32 %v837, 0.0
        %v964 = vmax.f32 %v840, 0.0
        %v965 = vmax.f32 %v845, 0.0
        %v966 = vmax.f32 %v848, 0.0
        %v967 = vmax.f32 %v853, 0.0
        %v968 = vmax.f32 %v856, 0.0
        %v969 = vmax.f32 %v861, 0.0
        %v970 = vmax.f32 %v864, 0.0
        %v971 = vmax.f32 %v869, 0.0
        %v972 = vmax.f32 %v872, 0.0
        %v973 = vmax.f32 %v877, 0.0
        %v974 = vmax.f32 %v880, 0.0
        %v975 = vmax.f32 %v885, 0.0
        %v976 = vmax.f32 %v888, 0.0
        %v977 = vmax.f32 %v893, 0.0
        %v978 = vmax.f32 %v896, 0.0
        %v979 = vmax.f32 %v901, 0.0
        %v980 = vmax.f32 %v904, 0.0
        %v981 = vmax.f32 %v909, 0.0
        %v982 = vmax.f32 %v912, 0.0
        %v983 = vmax.f32 %v917, 0.0
        %v984 = vmax.f32 %v920, 0.0
        %v985 = vmax.f32 %v925, 0.0
        %v986 = vmax.f32 %v928, 0.0
        %v987 = vmax.f32 %v933, 0.0
        %v988 = vmax.f32 %v936, 0.0
        %v989 = vmax.f32 %v941, 0.0
        %v990 = vmax.f32 %v944, 0.0
        %v991 = vmax.f32 %v949, 0.0
        %v992 = vmax.f32 %v952, 0.0
        %v993 = vmax.f32 %v957, 0.0
        %v994 = vmax.f32 %v960, 0.0
        %995 = vst [vmem:[#allocation8] sm:$0xff] %v963
        %996 = vst [vmem:[#allocation8 + $0x8] sm:$0xff] %v964
        %997 = vst [vmem:[#allocation8 + $0x10] sm:$0xff] %v965
        %998 = vst [vmem:[#allocation8 + $0x18] sm:$0xff] %v966
        %999 = vst [vmem:[#allocation8 + $0x20] sm:$0xff] %v967
        %1000 = vst [vmem:[#allocation8 + $0x28] sm:$0xff] %v968
        %1001 = vst [vmem:[#allocation8 + $0x30] sm:$0xff] %v969
        %1002 = vst [vmem:[#allocation8 + $0x38] sm:$0xff] %v970
        %1003 = vst [vmem:[#allocation8 + $0x40] sm:$0xff] %v971
        %1004 = vst [vmem:[#allocation8 + $0x48] sm:$0xff] %v972
        %1005 = vst [vmem:[#allocation8 + $0x50] sm:$0xff] %v973
        %1006 = vst [vmem:[#allocation8 + $0x58] sm:$0xff] %v974
        %1007 = vst [vmem:[#allocation8 + $0x60] sm:$0xff] %v975
        %1008 = vst [vmem:[#allocation8 + $0x68] sm:$0xff] %v976
        %1009 = vst [vmem:[#allocation8 + $0x70] sm:$0xff] %v977
        %1010 = vst [vmem:[#allocation8 + $0x78] sm:$0xff] %v978
        %1011 = vst [vmem:[#allocation8 + $0x80] sm:$0xff] %v979
        %1012 = vst [vmem:[#allocation8 + $0x88] sm:$0xff] %v980
        %1013 = vst [vmem:[#allocation8 + $0x90] sm:$0xff] %v981
        %1014 = vst [vmem:[#allocation8 + $0x98] sm:$0xff] %v982
        %1015 = vst [vmem:[#allocation8 + $0xa0] sm:$0xff] %v983
        %1016 = vst [vmem:[#allocation8 + $0xa8] sm:$0xff] %v984
        %1017 = vst [vmem:[#allocation8 + $0xb0] sm:$0xff] %v985
        %1018 = vst [vmem:[#allocation8 + $0xb8] sm:$0xff] %v986
        %1019 = vst [vmem:[#allocation8 + $0xc0] sm:$0xff] %v987
        %1020 = vst [vmem:[#allocation8 + $0xc8] sm:$0xff] %v988
        %1021 = vst [vmem:[#allocation8 + $0xd0] sm:$0xff] %v989
        %1022 = vst [vmem:[#allocation8 + $0xd8] sm:$0xff] %v990
        %1023 = vst [vmem:[#allocation8 + $0xe0] sm:$0xff] %v991
        %1024 = vst [vmem:[#allocation8 + $0xe8] sm:$0xff] %v992
        %1025 = vst [vmem:[#allocation8 + $0xf0] sm:$0xff] %v993
        %1026 = vst [vmem:[#allocation8 + $0xf8] sm:$0xff] %v994
        // Predicated region
        $region53: #{tpu_custom_call.1} parent=35 // pred_check
          %p1027 = pneg %p125
        $region54: #{tpu_custom_call.1} parent=35 // pred_check_branch
          %1029 = sbr.rel (%p1027) target = $region56
        $region55: #{tpu_custom_call.1} parent=35 // pred_region
          %s1031 = ssub.s32 4096, 4096
          %1032 = vsyncadd [#allocation4], %s1031
          %s1033 = sshll.u32 [#allocation8], 4
          %s1034 = int_to_ptr.vmem [resolvable:$true] %s1033
          %1039 = dma.vmem_to_hbm [thread:$0]  %s1034, 4096, %s4, [#allocation4], 128, 128, 8
        $region56: #{tpu_custom_call.1} parent=35 // pred_fallthru
          _
        // Predicated region
        $region57: #{tpu_custom_call.1} parent=35 // pred_check
          %p1040 = pneg %p125
        $region58: #{tpu_custom_call.1} parent=35 // pred_check_branch
          %1042 = sbr.rel (%p1040) target = $region60
        $region59: #{tpu_custom_call.1} parent=35 // pred_region
          %1043 = dma.done [#allocation4], 4096
        $region60: #{tpu_custom_call.1} parent=35 // pred_fallthru
          _
      $region36: #{tpu_custom_call.1} parent=5 // pred_fallthru
        _
      %p1044 = scmp.le.s32.totalorder 2, %s13
      // Predicated region
      $region61: #{tpu_custom_call.1} parent=5 // pred_check
        %p1045 = pneg %p1044
      $region62: #{tpu_custom_call.1} parent=5 // pred_check_branch
        %1047 = sbr.rel (%p1045) target = $region64
      $region63: #{tpu_custom_call.1} parent=5 // pred_region
        %s1048 = ssub.s32 %s13, 2
      $region64: #{tpu_custom_call.1} parent=5 // pred_fallthru
        _
    $region6: #{tpu_custom_call.1} parent=1 // loop_footer
      %s17 = sadd.s32 1, %s13
    $region7: #{tpu_custom_call.1} parent=1 // loop_footer_branch
      %12 = sbr.rel target = $region3
    $region8: #{tpu_custom_call.1} parent=1 // loop_exit
      _
    %1049 = vsyncpa [#allocation3], 1
    %s1050 = scalar_lea.sflag [#allocation3], 1
    %1051 = vsyncpa %s1050, 1
    %1052 = vsyncpa [#allocation6], 1
    %1053 = vsyncpa [#allocation4], 1
    %s1054 = scalar_lea.sflag [#allocation4], 1
    %1055 = vsyncpa %s1054, 1

</llo_original>
